<compile_context>
chip_gen: v7x
topology: tpu7x:2x2x1
jax: 0.10.0
libtpu: 0.0.40
codegen_flags: <defaults>
</compile_context>

<pallas_src>
import functools

import jax
import jax.numpy as jnp
from jax.experimental import pallas as pl
from jax.experimental.pallas import tpu as pltpu


def _lsce_partial_kernel(preds_ref, target_ref, out_ref, *,
                         block_rows, n_rows, need_row_mask):
    """Per-tile partial sums for label-smoothing cross entropy.

    Writes (loss_part, nll_part) into lanes 0/1 of this tile's (1,1,128) slot.
    """
    x = preds_ref[...].astype(jnp.float32)                 # (TB, C)
    t = target_ref[...]                                    # (TB, 1) int32

    # Numerically stable log-softmax (per row).
    m = jnp.max(x, axis=-1, keepdims=True)                 # (TB, 1)
    xm = x - m                                             # (TB, C)
    lse_m = jnp.log(jnp.sum(jnp.exp(xm), axis=-1, keepdims=True))  # (TB, 1)
    logp = xm - lse_m                                      # (TB, C) = log_softmax

    # Per-row partials.
    sum_logp = jnp.sum(logp, axis=-1, keepdims=True)       # (TB, 1)
    cols = jax.lax.broadcasted_iota(jnp.int32, logp.shape, 1)
    tgt_logp = jnp.sum(jnp.where(cols == t, logp, 0.0),
                       axis=-1, keepdims=True)             # (TB, 1)

    if need_row_mask:
        # Only the last (partial) tile needs this; rows past n_rows contain
        # stale VMEM garbage and must contribute exactly zero.  jnp.where is a
        # select, so NaN/Inf in masked-off rows is discarded.
        row0 = pl.program_id(0) * block_rows
        row_ids = jax.lax.broadcasted_iota(jnp.int32, (block_rows, 1), 0) + row0
        row_ok = row_ids < n_rows
        sum_logp = jnp.where(row_ok, sum_logp, 0.0)
        tgt_logp = jnp.where(row_ok, tgt_logp, 0.0)

    loss_part = -jnp.sum(sum_logp)   # tile sum of -sum_c log p
    nll_part = -jnp.sum(tgt_logp)    # tile sum of NLL terms

    # Lane-dense write: partials go to lanes 0 and 1 of this tile's slot.
    lane = jax.lax.broadcasted_iota(jnp.int32, out_ref.shape, 2)   # (1,1,128)
    out_ref[...] = (jnp.where(lane == 0, loss_part, 0.0)
                    + jnp.where(lane == 1, nll_part, 0.0)).astype(jnp.float32)


def _choose_block_rows(n_rows, n_classes, target_bytes=4 << 20):
    """Row tile so one f32-equivalent logits block is ~4 MiB (multiple of 8)."""
    n_pad8 = ((n_rows + 7) // 8) * 8
    # Budget using 4-byte elements even for bf16 inputs: in-kernel
    # intermediates are f32, and this keeps 2x buffers + temporaries safely
    # inside v7x's 64 MiB VMEM (and trivially inside v5e/v6e's 128 MiB).
    br = max(8, (target_bytes // max(1, n_classes * 4)) // 8 * 8)
    br = min(br, n_pad8)
    # Prefer >= 2 grid steps so a "parallel" grid axis can feed both v7x
    # TensorCores instead of idling one.
    if n_pad8 >= 16:
        half = ((n_pad8 // 2 + 7) // 8) * 8
        br = min(br, half)
    return int(br)


def label_smoothing_cross_entropy(preds, target, epsilon=0.1,
                                  reduction="mean", block_rows=None):
    """preds: (N, C) float (f32 or bf16); target: (N,) int. Returns scalar f32."""
    # TODO(synk): reduction='none' (per-row vector output) and nll_loss
    #             ignore_index semantics are not implemented.
    assert reduction in ("mean", "sum")
    n, c = preds.shape
    itemsize = jnp.dtype(preds.dtype).itemsize

    if block_rows is None:
        block_rows = _choose_block_rows(n, c)
    block_rows = int(block_rows)
    assert block_rows % 8 == 0, "row tile must be a multiple of 8 sublanes"

    num_tiles = pl.cdiv(n, block_rows)
    target2d = target.astype(jnp.int32).reshape(n, 1)

    kernel = functools.partial(
        _lsce_partial_kernel,
        block_rows=block_rows,                 # Python ints only
        n_rows=n,
        need_row_mask=(n % block_rows) != 0,   # compile out mask when exact
    )

    cost = pl.CostEstimate(
        flops=5 * n * c,
        transcendentals=n * (c + 1),
        bytes_accessed=n * c * itemsize + n * 4 + num_tiles * 512,
    )

    partials = pl.pallas_call(
        kernel,
        out_shape=jax.ShapeDtypeStruct((num_tiles, 1, 128), jnp.float32),
        grid_spec=pltpu.PrefetchScalarGridSpec(
            num_scalar_prefetch=0,
            grid=(num_tiles,),
            in_specs=[
                # Class dim = full array extent (satisfies the (8,128) rule via
                # full-dim match); no wrapper pad, no extra HBM copy.
                pl.BlockSpec((block_rows, c), lambda i: (i, 0)),
                pl.BlockSpec((block_rows, 1), lambda i: (i, 0)),
            ],
            out_specs=pl.BlockSpec((1, 1, 128), lambda i: (i, 0, 0)),
        ),
        compiler_params=pltpu.CompilerParams(
            # Tiles are fully independent -> shardable across TCs (v7x megacore).
            dimension_semantics=("parallel",),
            # ~4 MiB blocks x2 buffers + f32 intermediates; fits v7x's 64 MiB.
            vmem_limit_bytes=48 * 1024 * 1024,
        ),
        cost_estimate=cost,
    )(preds, target2d)

    loss_sum = jnp.sum(partials[:, 0, 0])
    nll_sum = jnp.sum(partials[:, 0, 1])
    if reduction == "mean":
        loss_red = loss_sum / jnp.float32(n)
        nll_red = nll_sum / jnp.float32(n)
    else:  # "sum"
        loss_red = loss_sum
        nll_red = nll_sum
    eps = jnp.float32(epsilon)
    return eps * (loss_red / jnp.float32(c)) + (1.0 - eps) * nll_red


def _reference(preds, target, epsilon=0.1, reduction="mean"):
    """Pure-JAX reference mirroring the PyTorch module."""
    n_cls = preds.shape[-1]
    log_preds = jax.nn.log_softmax(preds.astype(jnp.float32), axis=-1)
    per_row = -jnp.sum(log_preds, axis=-1)
    loss = jnp.mean(per_row) if reduction == "mean" else jnp.sum(per_row)
    nll_rows = -jnp.take_along_axis(
        log_preds, target[:, None].astype(jnp.int32), axis=-1)[:, 0]
    nll = jnp.mean(nll_rows) if reduction == "mean" else jnp.sum(nll_rows)
    return epsilon * (loss / n_cls) + (1 - epsilon) * nll


if __name__ == "__main__":
    key = jax.random.PRNGKey(0)

    # Case 1: tiny, single tile, C not a multiple of 128 (no wrapper pad).
    # Case 2: N not a multiple of the row tile -> exercises the partial-tile
    #         row mask and the multi-tile "parallel" grid path.
    cases = [(8, 32), (20, 100)]
    for (N, C) in cases:
        k1, k2, key = jax.random.split(key, 3)
        preds = jax.random.normal(k1, (N, C), dtype=jnp.float32)
        target = jax.random.randint(k2, (N,), 0, C, dtype=jnp.int32)
        for red in ("mean", "sum"):
            out = label_smoothing_cross_entropy(preds, target, epsilon=0.1,
                                                reduction=red)
            out = jax.block_until_ready(out)
            ref = _reference(preds, target, epsilon=0.1, reduction=red)
            assert jnp.allclose(out, ref, atol=1e-4, rtol=1e-5), \
                (N, C, red, out, ref)

    print("KERNEL_OK")
</pallas_src>

<mosaic_0001>
module attributes {stable_mosaic.version = 11 : i64} {
  func.func @_lsce_partial_kernel(%arg0: i32, %arg1: memref<8x32xf32, #tpu.memory_space<vmem>>, %arg2: memref<8x1xi32, #tpu.memory_space<vmem>>, %arg3: memref<1x1x128xf32, #tpu.memory_space<vmem>>) attributes {dimension_semantics = [#tpu.dimension_semantics<parallel>], iteration_bounds = array<i64: 1>, scalar_prefetch = 0 : i64, scratch_operands = 0 : i64, tpu.core_type = #tpu.core_type<tc>, window_params = [{transform_indices = @transform_0, window_bounds = array<i64: 8, 32>}, {transform_indices = @transform_1, window_bounds = array<i64: 8, 1>}, {transform_indices = @transform_2, window_bounds = array<i64: 1, 1, 128>}]} {
    %c0 = arith.constant 0 : index
    %c0_0 = arith.constant 0 : index
    %0 = vector.load %arg1[%c0, %c0_0] : memref<8x32xf32, #tpu.memory_space<vmem>>, vector<8x32xf32>
    %c0_1 = arith.constant 0 : index
    %c0_2 = arith.constant 0 : index
    %1 = vector.load %arg2[%c0_1, %c0_2] : memref<8x1xi32, #tpu.memory_space<vmem>>, vector<8x1xi32>
    %cst = arith.constant dense<0xFF800000> : vector<8xf32>
    %2 = vector.multi_reduction <maximumf>, %0, %cst [1] : vector<8x32xf32> to vector<8xf32>
    %3 = vector.shape_cast %2 : vector<8xf32> to vector<8x1xf32>
    %4 = vector.broadcast %3 : vector<8x1xf32> to vector<8x32xf32>
    %5 = arith.subf %0, %4 : vector<8x32xf32>
    %6 = math.exp %5 : vector<8x32xf32>
    %cst_3 = arith.constant dense<0.000000e+00> : vector<8xf32>
    %7 = vector.multi_reduction <add>, %6, %cst_3 [1] : vector<8x32xf32> to vector<8xf32>
    %8 = vector.shape_cast %7 : vector<8xf32> to vector<8x1xf32>
    %9 = math.log %8 : vector<8x1xf32>
    %10 = vector.broadcast %9 : vector<8x1xf32> to vector<8x32xf32>
    %11 = arith.subf %5, %10 : vector<8x32xf32>
    %cst_4 = arith.constant dense<0.000000e+00> : vector<8xf32>
    %12 = vector.multi_reduction <add>, %11, %cst_4 [1] : vector<8x32xf32> to vector<8xf32>
    %13 = vector.shape_cast %12 : vector<8xf32> to vector<8x1xf32>
    %14 = tpu.iota {dimensions = array<i32: 1>} : vector<8x32xi32>
    %15 = vector.broadcast %1 : vector<8x1xi32> to vector<8x32xi32>
    %16 = arith.cmpi eq, %14, %15 : vector<8x32xi32>
    %cst_5 = arith.constant 0.000000e+00 : f32
    %17 = vector.broadcast %cst_5 : f32 to vector<8x32xf32>
    %18 = arith.select %16, %11, %17 : vector<8x32xi1>, vector<8x32xf32>
    %cst_6 = arith.constant dense<0.000000e+00> : vector<8xf32>
    %19 = vector.multi_reduction <add>, %18, %cst_6 [1] : vector<8x32xf32> to vector<8xf32>
    %20 = vector.shape_cast %19 : vector<8xf32> to vector<8x1xf32>
    %21 = vector.shape_cast %13 : vector<8x1xf32> to vector<1x8x1xf32>
    %cst_7 = arith.constant dense<0.000000e+00> : vector<1xf32>
    %22 = vector.multi_reduction <add>, %21, %cst_7 [1, 2] : vector<1x8x1xf32> to vector<1xf32>
    %23 = vector.shape_cast %22 : vector<1xf32> to vector<1x1x1xf32>
    %24 = vector.extract %23[0, 0, 0] : f32 from vector<1x1x1xf32>
    %cst_8 = arith.constant 0.000000e+00 : f32
    %25 = arith.subf %cst_8, %24 : f32
    %26 = vector.shape_cast %20 : vector<8x1xf32> to vector<1x8x1xf32>
    %cst_9 = arith.constant dense<0.000000e+00> : vector<1xf32>
    %27 = vector.multi_reduction <add>, %26, %cst_9 [1, 2] : vector<1x8x1xf32> to vector<1xf32>
    %28 = vector.shape_cast %27 : vector<1xf32> to vector<1x1x1xf32>
    %29 = vector.extract %28[0, 0, 0] : f32 from vector<1x1x1xf32>
    %cst_10 = arith.constant 0.000000e+00 : f32
    %30 = arith.subf %cst_10, %29 : f32
    %31 = tpu.iota {dimensions = array<i32: 2>} : vector<1x1x128xi32>
    %c0_i32 = arith.constant 0 : i32
    %32 = vector.broadcast %c0_i32 : i32 to vector<1x1x128xi32>
    %33 = arith.cmpi eq, %31, %32 : vector<1x1x128xi32>
    %cst_11 = arith.constant 0.000000e+00 : f32
    %34 = vector.broadcast %25 : f32 to vector<1x1x128xf32>
    %35 = vector.broadcast %cst_11 : f32 to vector<1x1x128xf32>
    %36 = arith.select %33, %34, %35 : vector<1x1x128xi1>, vector<1x1x128xf32>
    %c1_i32 = arith.constant 1 : i32
    %37 = vector.broadcast %c1_i32 : i32 to vector<1x1x128xi32>
    %38 = arith.cmpi eq, %31, %37 : vector<1x1x128xi32>
    %cst_12 = arith.constant 0.000000e+00 : f32
    %39 = vector.broadcast %30 : f32 to vector<1x1x128xf32>
    %40 = vector.broadcast %cst_12 : f32 to vector<1x1x128xf32>
    %41 = arith.select %38, %39, %40 : vector<1x1x128xi1>, vector<1x1x128xf32>
    %42 = arith.addf %36, %41 : vector<1x1x128xf32>
    %c0_13 = arith.constant 0 : index
    %c0_14 = arith.constant 0 : index
    %c0_15 = arith.constant 0 : index
    %43 = vector.load %arg3[%c0_13, %c0_14, %c0_15] : memref<1x1x128xf32, #tpu.memory_space<vmem>>, vector<1x1x128xf32>
    tpu.vector_store %arg3[%c0_13, %c0_14, %c0_15], %42 {strides = array<i32>} : memref<1x1x128xf32, #tpu.memory_space<vmem>>, vector<1x1x128xf32>,
    return
  }
  func.func @transform_0(%arg0: i32) -> (i32, i32) {
    %c0_i32 = arith.constant 0 : i32
    %c0_i32_0 = arith.constant 0 : i32
    return %arg0, %c0_i32 : i32, i32
  }
  func.func @transform_1(%arg0: i32) -> (i32, i32) {
    %c0_i32 = arith.constant 0 : i32
    %c0_i32_0 = arith.constant 0 : i32
    return %arg0, %c0_i32 : i32, i32
  }
  func.func @transform_2(%arg0: i32) -> (i32, i32, i32) {
    %c0_i32 = arith.constant 0 : i32
    %c0_i32_0 = arith.constant 0 : i32
    %c0_i32_1 = arith.constant 0 : i32
    return %arg0, %c0_i32, %c0_i32_0 : i32, i32, i32
  }
}

</mosaic_0001>

<llo_original>
// kernel: tpu_custom_call.1
$region0: #{tpu_custom_call.1}
  #allocation0 [shape = 'u32[]', space=smem, size = 0x4, offset = 0x4, fixed_abs, tag = 'smem constant byte address 0x4 - core index']
  #allocation1 [shape = 'u32[144,128]{1,0:T(1,128)}', space=vmem, size = 0x12000, scoped, tag = 'internal scratch']
  %s0 = inlined_call_operand.vmem [shape: f32[8,32], index: 0, kind: input, shape index: {}]
  %s1 = inlined_call_operand.vmem [shape: s32[8,1], index: 1, kind: input, shape index: {}]
  %s2 = inlined_call_operand.hbm [shape: f32[1,1,128], index: 2, kind: output, shape index: {}]
  %s3 = sld [smem:[#allocation0]]
  $region18: #{tpu_custom_call.1} parent=0
    _
  %s5 = ssub.s32 1, %s3
  %s6 = scalar_select 0, %s5, %s3
  $region1: #{tpu_custom_call.1} parent=0
    #allocation2 [shape = 'u8[512]{0}', space=vmem, size = 0x400, scoped, tag = 'output window, operand 0, single buffered']
    #allocation3 [shape = 's32[1]{0}', space=sflag, size = 0x4, scoped, tag = 'scoped memory for tpu_custom_call.1']
    %7 = vsyncpa [#allocation3], 0
    // Predicated region
    $region2: #{tpu_custom_call.1} parent=1 // pred_check
      _
    $region3: #{tpu_custom_call.1} parent=1 // pred_check_branch
      %9 = sbr.rel (0) target = $region5
    $region4: #{tpu_custom_call.1} parent=1 // pred_region
      _
    $region5: #{tpu_custom_call.1} parent=1 // pred_fallthru
      _
    // Predicated region
    $region6: #{tpu_custom_call.1} parent=1 // pred_check
      _
    $region7: #{tpu_custom_call.1} parent=1 // pred_check_branch
      %11 = sbr.rel (0) target = $region9
    $region8: #{tpu_custom_call.1} parent=1 // pred_region
      _
    $region9: #{tpu_custom_call.1} parent=1 // pred_fallthru
      _
    %v12 = vld [vmem:[%s0] sm:$0xff]
    %v13 = vld [vmem:[%s1] sm:$0xff]
    %vm14 = vcmask 261120
    %v15 = vsel %vm14, %v12, -inf
    %16 = vmax.xlane.f32.xlu0 %v15
    %v17 = vpop.xlane.xlu0 %16
    %v18 = vsub.f32 %v12, %v17
    %v19 = vmul.f32 %v18, 1.442695
    %v20 = vpow.pop %v19
    %v21 = vsel %vm14, %v20, 0.0
    %22 = vadd.xlane.f32.xlu0 %v21
    %v23 = vpop.xlane.xlu0 %22
    %v24 = vlog2.pop %v23
    %v25 = vmul.f32 %v24, 0.6931472
    %v26 = vsub.f32 %v18, %v25
    %v27 = vsel %vm14, %v26, 0.0
    %28 = vadd.xlane.f32.xlu0 %v27
    %v29 = vpop.xlane.xlu0 %28
    %v30 = vlaneseq
    %v31 = vand.u32 %v30, 127
    %32 = vset.pattern.permute.xlu0 0
    %33 = vperm.xlu0 %32, %v13
    %v34 = vpop.permute.xlu0 %33
    %vm35 = vcmp.eq.s32.totalorder %v31, %v34
    %v36 = vsel %vm35, %v26, 0.0
    %v37 = vsel %vm14, %v36, 0.0
    %38 = vadd.xlane.f32.xlu0 %v37
    %v39 = vpop.xlane.xlu0 %38
    %vm40 = vcmask 7168
    %v41 = vsel %vm40, %v29, 0.0
    %42 = vadd.xlane.f32.xlu0 %v41
    %v43 = vpop.xlane.xlu0 %42
    %v44 = vrot.slane %v43, 4
    %v45 = vadd.f32 %v43, %v44
    %v46 = vrot.slane %v45, 2
    %v47 = vadd.f32 %v45, %v46
    %v48 = vrot.slane %v47, 1
    %v49 = vadd.f32 %v47, %v48
    %s50 = vtos %v49
    %s51 = ssub.f32 0.0, %s50
    %v52 = vsel %vm40, %v39, 0.0
    %53 = vadd.xlane.f32.xlu0 %v52
    %v54 = vpop.xlane.xlu0 %53
    %v55 = vrot.slane %v54, 4
    %v56 = vadd.f32 %v54, %v55
    %v57 = vrot.slane %v56, 2
    %v58 = vadd.f32 %v56, %v57
    %v59 = vrot.slane %v58, 1
    %v60 = vadd.f32 %v58, %v59
    %s61 = vtos %v60
    %s62 = ssub.f32 0.0, %s61
    %vm63 = vcmp.eq.s32.totalorder %v31, 0
    %v64 = vstv %s51
    %v65 = vsel %vm63, %v64, 0.0
    %vm66 = vcmp.eq.s32.totalorder %v31, 1
    %v67 = vstv %s62
    %v68 = vsel %vm66, %v67, 0.0
    %v69 = vadd.f32 %v65, %v68
    %70 = vst [vmem:[#allocation2] sm:$0x1] %v69
    // Predicated region
    $region10: #{tpu_custom_call.1} parent=1 // pred_check
      _
    $region11: #{tpu_custom_call.1} parent=1 // pred_check_branch
      %72 = sbr.rel (0) target = $region13
    $region12: #{tpu_custom_call.1} parent=1 // pred_region
      %s74 = ssub.s32 16, 16
      %75 = vsyncadd [#allocation3], %s74
      %s77 = sshll.u32 [#allocation2], 4
      %s78 = int_to_ptr.vmem [resolvable:$true] %s77
      %80 = dma.vmem_to_hbm [thread:$0]  %s78, 16, %s2, [#allocation3]
    $region13: #{tpu_custom_call.1} parent=1 // pred_fallthru
      _
    // Predicated region
    $region14: #{tpu_custom_call.1} parent=1 // pred_check
      _
    $region15: #{tpu_custom_call.1} parent=1 // pred_check_branch
      %82 = sbr.rel (0) target = $region17
    $region16: #{tpu_custom_call.1} parent=1 // pred_region
      %83 = dma.done [#allocation3], 16
    $region17: #{tpu_custom_call.1} parent=1 // pred_fallthru
      _
    %84 = vsyncpa [#allocation3], 1

</llo_original>
